<compile_context>
chip_gen: v7x
topology: tpu7x:2x2x1
jax: 0.10.0
libtpu: 0.0.40
codegen_flags: <defaults>
</compile_context>

<pallas_src>
import jax
import jax.numpy as jnp
import numpy as np
from jax.experimental import pallas as pl
from jax.experimental.pallas import tpu as pltpu

# ----- small, module-consistent sizes -----
F = 32           # feature_dim
E = 32           # embed_dim
B = 8            # batch of node ids
K = 8            # max neighbors per relation (padded)
NUM_NODES = 64   # size of the feature/embedding table
N_POS = 8        # |train_pos|
N_NEG = 8        # |train_neg|
N_REL = 3        # number of relations
S = 1 + N_REL * K                 # selector slots per node: self + 3*K neighbors
N4 = (N_REL + 1) * NUM_NODES      # virtual stacked table [self | rel1 | rel2 | rel3]
F4 = (N_REL + 1) * F              # 128 : contraction depth of the fused transform
OUT_D = F + N_REL * E             # 128 : output lanes


# ---------------------------------------------------------------------------
# Kernel
# ---------------------------------------------------------------------------
def interagg_kernel(feat_ref, idx_ref, w_ref, wpad_ref, pn_idx_ref, pn_scale_ref,
                    out_ref, pn_ref, xd_ref):
    """Fused in-kernel gather + masked-mean + per-relation transform + label means."""
    feats = feat_ref[...]                                             # (NUM_NODES, F)

    # Block-diagonal feature table in VMEM scratch: block p = features placed at
    # rows [p*N, (p+1)*N), lanes [p*F, (p+1)*F).  Multiplying the selector against it
    # performs the gather AND drops every block into its final lane slot (no concats).
    xd_ref[...] = jnp.zeros_like(xd_ref)
    for p in range(N_REL + 1):                                        # static unroll (4)
        xd_ref[p * NUM_NODES:(p + 1) * NUM_NODES, p * F:(p + 1) * F] = feats

    # One lane-dense pass builds the (B, 4*NUM_NODES) selector matrix:
    #   slot 0           -> one-hot(node)                      weight 1        (self)
    #   slot 1 + r*K + k -> one-hot(nbr + (r+1)*NUM_NODES)     weight mask/cnt (agg_r)
    idx = idx_ref[...]                                                # (B, S) int32, pre-offset
    w = w_ref[...]                                                    # (B, S) f32, 1/cnt folded in
    pos = jax.lax.broadcasted_iota(jnp.int32, (*idx.shape, N4), 2)    # (B, S, 4N)
    sel = jnp.where(idx[:, :, None] == pos, w[:, :, None], 0.0)       # (B, S, 4N)
    g = jnp.sum(sel, axis=1)                                          # (B, 4N)

    # Fused gather + masked mean + lane placement: cat = [self|agg1|agg2|agg3] (B, 4F).
    cat = jnp.dot(g, xd_ref[...], preferred_element_type=jnp.float32)

    # Fused per-relation transforms + self pass-through (identity block in wpad).
    # Note: if bit-exact parity of the self lanes with the torch gather is required,
    # use precision=HIGHEST on the dots or keep an explicit self concat.
    pre = jnp.dot(cat, wpad_ref[...], preferred_element_type=jnp.float32)   # (B, F+3E)
    lane = jax.lax.broadcasted_iota(jnp.int32, pre.shape, 1)
    out_ref[...] = jnp.where(lane < F, pre, jnp.maximum(pre, 0.0)).astype(out_ref.dtype)

    # update_label_vector (first call): pos/neg vectors are plain means, merged (2, F).
    pidx = pn_idx_ref[...]                                            # (2, N_POS)
    piota = jax.lax.broadcasted_iota(jnp.int32, (*pidx.shape, NUM_NODES), 2)
    counts = jnp.sum(jnp.where(pidx[:, :, None] == piota, 1.0, 0.0), axis=1)  # (2, NUM_NODES)
    wpn = counts * pn_scale_ref[...]                                  # rows scaled by 1/N_pos, 1/N_neg
    pn_ref[...] = jnp.dot(wpn, feats, preferred_element_type=jnp.float32).astype(pn_ref.dtype)


# ---------------------------------------------------------------------------
# Wrapper (index/weight prep + pallas_call; no gathers, no feature movement here)
# ---------------------------------------------------------------------------
def build_padded_weight(intra_weights):
    """(3, 2F, E) -> (4F, F+3E) block matrix with an identity self-pass-through block:
       [self|a1|a2|a3] @ W_pad == [self | [self|a1]@W1 | [self|a2]@W2 | [self|a3]@W3]."""
    w = jnp.zeros((F4, OUT_D), jnp.float32)
    w = w.at[:F, :F].set(jnp.eye(F, dtype=jnp.float32))
    for r in range(N_REL):
        w = w.at[:F, F + r * E:F + (r + 1) * E].set(intra_weights[r, :F])
        w = w.at[F + r * F:F + (r + 1) * F, F + r * E:F + (r + 1) * E].set(intra_weights[r, F:])
    return w


def interagg_forward(features, nodes, nbr_idx, nbr_mask, intra_weights,
                     train_pos, train_neg):
    b = nodes.shape[0]
    nodes = nodes.astype(jnp.int32)

    # per-relation index offsets into the virtual stacked table [self|rel1|rel2|rel3]
    rel_off = (jnp.arange(N_REL, dtype=jnp.int32) + 1)[:, None, None] * NUM_NODES
    nbr_off = nbr_idx.astype(jnp.int32) + rel_off                              # (3, B, K)
    idx_all = jnp.concatenate(
        [nodes[:, None], jnp.transpose(nbr_off, (1, 0, 2)).reshape(b, N_REL * K)], axis=1)

    # exact 1/cnt folded into the mask weights (no in-kernel count reduce / reciprocal)
    cnt = jnp.maximum(jnp.sum(nbr_mask, axis=2, keepdims=True), 1.0)           # (3, B, 1)
    nbr_w = nbr_mask / cnt                                                     # (3, B, K)
    w_all = jnp.concatenate(
        [jnp.ones((b, 1), jnp.float32),
         jnp.transpose(nbr_w, (1, 0, 2)).reshape(b, N_REL * K)], axis=1)

    w_pad = build_padded_weight(intra_weights)                                 # (4F, F+3E)

    pn_idx = jnp.stack([train_pos, train_neg]).astype(jnp.int32)               # (2, N_POS)
    pn_scale = jnp.array([[1.0 / train_pos.shape[0]],
                          [1.0 / train_neg.shape[0]]], jnp.float32)            # (2, 1)

    vmem = pl.BlockSpec(memory_space=pltpu.MemorySpace.VMEM)
    cat_feats, pn_vec = pl.pallas_call(
        interagg_kernel,
        out_shape=(jax.ShapeDtypeStruct((b, OUT_D), jnp.float32),
                   jax.ShapeDtypeStruct((2, F), jnp.float32)),
        in_specs=[vmem] * 6,
        out_specs=(vmem, vmem),
        scratch_shapes=[pltpu.VMEM((N4, F4), jnp.float32)],
    )(features, idx_all, w_all, w_pad, pn_idx, pn_scale)

    return cat_feats, pn_vec[0:1], pn_vec[1:2]


# ---------------------------------------------------------------------------
# Pure-JAX reference (for a mixed-precision-tolerant sanity check)
# ---------------------------------------------------------------------------
def reference_forward(features, nodes, nbr_idx, nbr_mask, intra_weights,
                      train_pos, train_neg):
    self_f = features[nodes]
    parts = [self_f]
    for r in range(N_REL):
        nf = features[nbr_idx[r]]                                     # (B, K, F)
        m = nbr_mask[r]
        cnt = jnp.maximum(jnp.sum(m, axis=1, keepdims=True), 1.0)
        agg = jnp.sum(nf * m[:, :, None], axis=1) / cnt
        h = jnp.maximum(jnp.concatenate([self_f, agg], axis=1) @ intra_weights[r], 0.0)
        parts.append(h)
    cat = jnp.concatenate(parts, axis=1)
    pos_vec = jnp.mean(features[train_pos], axis=0, keepdims=True)
    neg_vec = jnp.mean(features[train_neg], axis=0, keepdims=True)
    return cat, pos_vec, neg_vec


def xavier_uniform(key, shape):
    fan_in, fan_out = shape[0], shape[1]
    limit = jnp.sqrt(6.0 / (fan_in + fan_out))
    return jax.random.uniform(key, shape, jnp.float32, -limit, limit)


# ---------------------------------------------------------------------------
# Deterministic example inputs
# ---------------------------------------------------------------------------
if __name__ == "__main__":
    key = jax.random.PRNGKey(0)
    keys = jax.random.split(key, 12)

    # node feature / embedding table
    features = jax.random.normal(keys[0], (NUM_NODES, F), jnp.float32)

    # batch node ids + padded adjacency (3 relations) with masks
    nodes = jax.random.randint(keys[1], (B,), 0, NUM_NODES, jnp.int32)
    nbr_idx = jax.random.randint(keys[2], (N_REL, B, K), 0, NUM_NODES, jnp.int32)
    nbr_mask = (jax.random.uniform(keys[3], (N_REL, B, K)) < 0.7).astype(jnp.float32)
    # every node keeps at least its self-loop neighbor (set(adj_list[node]) incl. self)
    nbr_mask = nbr_mask.at[:, :, 0].set(1.0)
    nbr_idx = nbr_idx.at[:, :, 0].set(jnp.broadcast_to(nodes[None, :], (N_REL, B)))

    # intra-relation aggregator weights (one per relation), stacked (3, 2F, E)
    intra_weights = jnp.stack([xavier_uniform(keys[4 + r], (2 * F, E)) for r in range(N_REL)])

    # InterAgg's own parameters — initialized for parity with __init__ but (exactly as
    # in the PyTorch forward) unused here; they only feed losses elsewhere.
    _inter_weight = xavier_uniform(keys[7], (E + F, E))   # self.weight   (unused in fwd)
    _alpha = xavier_uniform(keys[8], (E, 3))              # self.alpha    (unused in fwd)
    _label_clf_w = xavier_uniform(keys[9], (2, F))        # self.label_clf (unused in fwd)

    # training-set positive / negative indices
    train_pos = jax.random.randint(keys[10], (N_POS,), 0, NUM_NODES, jnp.int32)
    train_neg = jax.random.randint(keys[11], (N_NEG,), 0, NUM_NODES, jnp.int32)

    cat_feats, pos_vec, neg_vec = interagg_forward(
        features, nodes, nbr_idx, nbr_mask, intra_weights, train_pos, train_neg)
    jax.block_until_ready((cat_feats, pos_vec, neg_vec))

    assert cat_feats.shape == (B, F + N_REL * E)
    assert pos_vec.shape == (1, F) and neg_vec.shape == (1, F)

    # sanity check vs. pure-JAX reference (tolerant of MXU f32 operand rounding)
    ref_cat, ref_pos, ref_neg = reference_forward(
        features, nodes, nbr_idx, nbr_mask, intra_weights, train_pos, train_neg)
    np.testing.assert_allclose(np.asarray(cat_feats), np.asarray(ref_cat), rtol=5e-2, atol=5e-2)
    np.testing.assert_allclose(np.asarray(pos_vec), np.asarray(ref_pos), rtol=5e-2, atol=5e-2)
    np.testing.assert_allclose(np.asarray(neg_vec), np.asarray(ref_neg), rtol=5e-2, atol=5e-2)

    print("KERNEL_OK")
</pallas_src>

<mosaic_0001>
module attributes {stable_mosaic.version = 11 : i64} {
  func.func @interagg_kernel(%arg0: memref<64x32xf32, #tpu.memory_space<vmem>>, %arg1: memref<8x25xi32, #tpu.memory_space<vmem>>, %arg2: memref<8x25xf32, #tpu.memory_space<vmem>>, %arg3: memref<128x128xf32, #tpu.memory_space<vmem>>, %arg4: memref<2x8xi32, #tpu.memory_space<vmem>>, %arg5: memref<2x1xf32, #tpu.memory_space<vmem>>, %arg6: memref<8x128xf32, #tpu.memory_space<vmem>>, %arg7: memref<2x32xf32, #tpu.memory_space<vmem>>, %arg8: memref<256x128xf32, #tpu.memory_space<vmem>>) attributes {dimension_semantics = [], scalar_prefetch = 0 : i64, scratch_operands = 1 : i64, tpu.core_type = #tpu.core_type<tc>} {
    %c0 = arith.constant 0 : index
    %c0_0 = arith.constant 0 : index
    %0 = vector.load %arg0[%c0, %c0_0] : memref<64x32xf32, #tpu.memory_space<vmem>>, vector<64x32xf32>
    %cst = arith.constant 0.000000e+00 : f32
    %1 = vector.broadcast %cst : f32 to vector<256x128xf32>
    %c0_1 = arith.constant 0 : index
    %c0_2 = arith.constant 0 : index
    %2 = vector.load %arg8[%c0_1, %c0_2] : memref<256x128xf32, #tpu.memory_space<vmem>>, vector<256x128xf32>
    tpu.vector_store %arg8[%c0_1, %c0_2], %1 {strides = array<i32>} : memref<256x128xf32, #tpu.memory_space<vmem>>, vector<256x128xf32>,
    %c0_3 = arith.constant 0 : index
    %c0_4 = arith.constant 0 : index
    %3 = vector.load %arg8[%c0_3, %c0_4] : memref<256x128xf32, #tpu.memory_space<vmem>>, vector<64x32xf32>
    tpu.vector_store %arg8[%c0_3, %c0_4], %0 {strides = array<i32>} : memref<256x128xf32, #tpu.memory_space<vmem>>, vector<64x32xf32>,
    %c64 = arith.constant 64 : index
    %c32 = arith.constant 32 : index
    %4 = vector.load %arg8[%c64, %c32] : memref<256x128xf32, #tpu.memory_space<vmem>>, vector<64x32xf32>
    tpu.vector_store %arg8[%c64, %c32], %0 {strides = array<i32>} : memref<256x128xf32, #tpu.memory_space<vmem>>, vector<64x32xf32>,
    %c128 = arith.constant 128 : index
    %c64_5 = arith.constant 64 : index
    %5 = vector.load %arg8[%c128, %c64_5] : memref<256x128xf32, #tpu.memory_space<vmem>>, vector<64x32xf32>
    tpu.vector_store %arg8[%c128, %c64_5], %0 {strides = array<i32>} : memref<256x128xf32, #tpu.memory_space<vmem>>, vector<64x32xf32>,
    %c192 = arith.constant 192 : index
    %c96 = arith.constant 96 : index
    %6 = vector.load %arg8[%c192, %c96] : memref<256x128xf32, #tpu.memory_space<vmem>>, vector<64x32xf32>
    tpu.vector_store %arg8[%c192, %c96], %0 {strides = array<i32>} : memref<256x128xf32, #tpu.memory_space<vmem>>, vector<64x32xf32>,
    %c0_6 = arith.constant 0 : index
    %c0_7 = arith.constant 0 : index
    %7 = vector.load %arg1[%c0_6, %c0_7] : memref<8x25xi32, #tpu.memory_space<vmem>>, vector<8x25xi32>
    %c0_8 = arith.constant 0 : index
    %c0_9 = arith.constant 0 : index
    %8 = vector.load %arg2[%c0_8, %c0_9] : memref<8x25xf32, #tpu.memory_space<vmem>>, vector<8x25xf32>
    %9 = tpu.iota {dimensions = array<i32: 2>} : vector<8x25x256xi32>
    %10 = vector.shape_cast %7 : vector<8x25xi32> to vector<8x25x1xi32>
    %11 = vector.broadcast %10 : vector<8x25x1xi32> to vector<8x25x256xi32>
    %12 = arith.cmpi eq, %11, %9 : vector<8x25x256xi32>
    %13 = vector.shape_cast %8 : vector<8x25xf32> to vector<8x25x1xf32>
    %cst_10 = arith.constant 0.000000e+00 : f32
    %14 = vector.shape_cast %13 : vector<8x25x1xf32> to vector<8x25x1xf32>
    %15 = vector.broadcast %14 : vector<8x25x1xf32> to vector<8x25x256xf32>
    %16 = vector.broadcast %cst_10 : f32 to vector<8x25x256xf32>
    %17 = arith.select %12, %15, %16 : vector<8x25x256xi1>, vector<8x25x256xf32>
    %cst_11 = arith.constant dense<0.000000e+00> : vector<8x256xf32>
    %18 = vector.multi_reduction <add>, %17, %cst_11 [1] : vector<8x25x256xf32> to vector<8x256xf32>
    %c0_12 = arith.constant 0 : index
    %c0_13 = arith.constant 0 : index
    %19 = vector.load %arg8[%c0_12, %c0_13] : memref<256x128xf32, #tpu.memory_space<vmem>>, vector<256x128xf32>
    %cst_14 = arith.constant dense<0.000000e+00> : vector<8x128xf32>
    %20 = tpu.matmul %18, %19, %cst_14 {dimension_numbers = #tpu.dot_dimension_numbers<[1], [0], [0], [1], [0, 0, 1, 1], [], []>} : vector<8x256xf32>, vector<256x128xf32>, vector<8x128xf32> -> vector<8x128xf32>
    %c0_15 = arith.constant 0 : index
    %c0_16 = arith.constant 0 : index
    %21 = vector.load %arg3[%c0_15, %c0_16] : memref<128x128xf32, #tpu.memory_space<vmem>>, vector<128x128xf32>
    %cst_17 = arith.constant dense<0.000000e+00> : vector<8x128xf32>
    %22 = tpu.matmul %20, %21, %cst_17 {dimension_numbers = #tpu.dot_dimension_numbers<[1], [0], [0], [1], [0, 0, 1, 1], [], []>} : vector<8x128xf32>, vector<128x128xf32>, vector<8x128xf32> -> vector<8x128xf32>
    %23 = tpu.iota {dimensions = array<i32: 1>} : vector<8x128xi32>
    %c32_i32 = arith.constant 32 : i32
    %24 = vector.broadcast %c32_i32 : i32 to vector<8x128xi32>
    %25 = arith.cmpi slt, %23, %24 : vector<8x128xi32>
    %cst_18 = arith.constant 0.000000e+00 : f32
    %26 = vector.broadcast %cst_18 : f32 to vector<8x128xf32>
    %27 = arith.maximumf %22, %26 : vector<8x128xf32>
    %28 = arith.select %25, %22, %27 : vector<8x128xi1>, vector<8x128xf32>
    %c0_19 = arith.constant 0 : index
    %c0_20 = arith.constant 0 : index
    %29 = vector.load %arg6[%c0_19, %c0_20] : memref<8x128xf32, #tpu.memory_space<vmem>>, vector<8x128xf32>
    tpu.vector_store %arg6[%c0_19, %c0_20], %28 {strides = array<i32>} : memref<8x128xf32, #tpu.memory_space<vmem>>, vector<8x128xf32>,
    %c0_21 = arith.constant 0 : index
    %c0_22 = arith.constant 0 : index
    %30 = vector.load %arg4[%c0_21, %c0_22] : memref<2x8xi32, #tpu.memory_space<vmem>>, vector<2x8xi32>
    %31 = tpu.iota {dimensions = array<i32: 2>} : vector<2x8x64xi32>
    %32 = vector.shape_cast %30 : vector<2x8xi32> to vector<2x8x1xi32>
    %33 = vector.broadcast %32 : vector<2x8x1xi32> to vector<2x8x64xi32>
    %34 = arith.cmpi eq, %33, %31 : vector<2x8x64xi32>
    %cst_23 = arith.constant 1.000000e+00 : f32
    %cst_24 = arith.constant 0.000000e+00 : f32
    %35 = vector.broadcast %cst_23 : f32 to vector<2x8x64xf32>
    %36 = vector.broadcast %cst_24 : f32 to vector<2x8x64xf32>
    %37 = arith.select %34, %35, %36 : vector<2x8x64xi1>, vector<2x8x64xf32>
    %cst_25 = arith.constant dense<0.000000e+00> : vector<2x64xf32>
    %38 = vector.multi_reduction <add>, %37, %cst_25 [1] : vector<2x8x64xf32> to vector<2x64xf32>
    %c0_26 = arith.constant 0 : index
    %c0_27 = arith.constant 0 : index
    %39 = vector.load %arg5[%c0_26, %c0_27] : memref<2x1xf32, #tpu.memory_space<vmem>>, vector<2x1xf32>
    %40 = vector.broadcast %39 : vector<2x1xf32> to vector<2x64xf32>
    %41 = arith.mulf %38, %40 : vector<2x64xf32>
    %cst_28 = arith.constant dense<0.000000e+00> : vector<2x32xf32>
    %42 = tpu.matmul %41, %0, %cst_28 {dimension_numbers = #tpu.dot_dimension_numbers<[1], [0], [0], [1], [0, 0, 1, 1], [], []>} : vector<2x64xf32>, vector<64x32xf32>, vector<2x32xf32> -> vector<2x32xf32>
    %c0_29 = arith.constant 0 : index
    %c0_30 = arith.constant 0 : index
    %43 = vector.load %arg7[%c0_29, %c0_30] : memref<2x32xf32, #tpu.memory_space<vmem>>, vector<2x32xf32>
    tpu.vector_store %arg7[%c0_29, %c0_30], %42 {strides = array<i32>} : memref<2x32xf32, #tpu.memory_space<vmem>>, vector<2x32xf32>,
    return
  }
}

</mosaic_0001>

<llo_original>
// kernel: tpu_custom_call.1
$region0: #{tpu_custom_call.1}
  #allocation0 [shape = 'u32[]', space=smem, size = 0x4, offset = 0x4, fixed_abs, tag = 'smem constant byte address 0x4 - core index']
  #allocation1 [shape = 'u32[144,128]{1,0:T(1,128)}', space=vmem, size = 0x12000, scoped, tag = 'internal scratch']
  #allocation2 [shape = 'f32[256,128]{1,0:T(8,128)}', space=vmem, size = 0x20000, scoped, tag = 'scratch operand']
  %s0 = inlined_call_operand.vmem [shape: f32[64,32], index: 0, kind: input, shape index: {}]
  %s1 = inlined_call_operand.vmem [shape: s32[8,25], index: 1, kind: input, shape index: {}]
  %s2 = inlined_call_operand.vmem [shape: f32[8,25], index: 2, kind: input, shape index: {}]
  %s3 = inlined_call_operand.hbm [shape: f32[128,128], index: 3, kind: input, shape index: {}]
  %s4 = inlined_call_operand.vmem [shape: s32[2,8], index: 4, kind: input, shape index: {}]
  %s5 = inlined_call_operand.vmem [shape: f32[2,1], index: 5, kind: input, shape index: {}]
  %s6 = inlined_call_operand.hbm [shape: f32[8,128], index: 6, kind: output, shape index: {0}]
  %s7 = inlined_call_operand.hbm [shape: f32[2,32], index: 7, kind: output, shape index: {1}]
  %8 = xla_tuple %s6, %s7
  %s9 = sld [smem:[#allocation0]]
  $region46: #{tpu_custom_call.1} parent=0
    _
  %s11 = ssub.s32 1, %s9
  %s12 = scalar_select 0, %s11, %s9
  $region1: #{tpu_custom_call.1} parent=0
    #allocation3 [shape = 'u8[65536]{0}', space=vmem, size = 0x10000, scoped, tag = 'input window, operand 3, single buffered']
    #allocation4 [shape = 's32[1]{0}', space=sflag, size = 0x4, scoped, tag = 'scoped memory for tpu_custom_call.1']
    #allocation5 [shape = 's32[1]{0}', space=sflag, size = 0x4, scoped, tag = 'scoped memory for tpu_custom_call.1']
    #allocation6 [shape = 'u8[4096]{0}', space=vmem, size = 0x1000, scoped, tag = 'output window, operand 0, single buffered']
    #allocation7 [shape = 'u8[1024]{0}', space=vmem, size = 0x400, scoped, tag = 'output window, operand 1, single buffered']
    #allocation8 [shape = 's32[1]{0}', space=sflag, size = 0x4, scoped, tag = 'scoped memory for tpu_custom_call.1']
    %13 = vsyncpa [#allocation4], 0
    %14 = vsyncpa [#allocation5], 0
    %15 = vsyncpa [#allocation8], 0
    // Predicated region
    $region2: #{tpu_custom_call.1} parent=1 // pred_check
      _
    $region3: #{tpu_custom_call.1} parent=1 // pred_check_branch
      %17 = sbr.rel (0) target = $region5
    $region4: #{tpu_custom_call.1} parent=1 // pred_region
      _
    $region5: #{tpu_custom_call.1} parent=1 // pred_fallthru
      _
    // Predicated region
    $region6: #{tpu_custom_call.1} parent=1 // pred_check
      _
    $region7: #{tpu_custom_call.1} parent=1 // pred_check_branch
      %19 = sbr.rel (0) target = $region9
    $region8: #{tpu_custom_call.1} parent=1 // pred_region
      _
    $region9: #{tpu_custom_call.1} parent=1 // pred_fallthru
      _
    // Predicated region
    $region10: #{tpu_custom_call.1} parent=1 // pred_check
      _
    $region11: #{tpu_custom_call.1} parent=1 // pred_check_branch
      %21 = sbr.rel (0) target = $region13
    $region12: #{tpu_custom_call.1} parent=1 // pred_region
      _
    $region13: #{tpu_custom_call.1} parent=1 // pred_fallthru
      _
    // Predicated region
    $region14: #{tpu_custom_call.1} parent=1 // pred_check
      _
    $region15: #{tpu_custom_call.1} parent=1 // pred_check_branch
      %23 = sbr.rel (0) target = $region17
    $region16: #{tpu_custom_call.1} parent=1 // pred_region
      %s25 = ssub.s32 2048, 2048
      %26 = vsyncadd [#allocation4], %s25
      %s27 = sshll.u32 [#allocation3], 4
      %s28 = int_to_ptr.vmem [resolvable:$true] %s27
      %33 = dma.hbm_to_vmem [thread:$0]  %s3, 2048, %s28, [#allocation4], 128, 128, 8
    $region17: #{tpu_custom_call.1} parent=1 // pred_fallthru
      _
    // Predicated region
    $region18: #{tpu_custom_call.1} parent=1 // pred_check
      _
    $region19: #{tpu_custom_call.1} parent=1 // pred_check_branch
      %35 = sbr.rel (0) target = $region21
    $region20: #{tpu_custom_call.1} parent=1 // pred_region
      _
    $region21: #{tpu_custom_call.1} parent=1 // pred_fallthru
      _
    // Predicated region
    $region22: #{tpu_custom_call.1} parent=1 // pred_check
      _
    $region23: #{tpu_custom_call.1} parent=1 // pred_check_branch
      %37 = sbr.rel (0) target = $region25
    $region24: #{tpu_custom_call.1} parent=1 // pred_region
      _
    $region25: #{tpu_custom_call.1} parent=1 // pred_fallthru
      _
    // Predicated region
    $region26: #{tpu_custom_call.1} parent=1 // pred_check
      _
    $region27: #{tpu_custom_call.1} parent=1 // pred_check_branch
      %39 = sbr.rel (0) target = $region29
    $region28: #{tpu_custom_call.1} parent=1 // pred_region
      %40 = dma.done [#allocation4], 2048
    $region29: #{tpu_custom_call.1} parent=1 // pred_fallthru
      _
    %v41 = vld [vmem:[%s0] sm:$0xff]
    %v42 = vld [vmem:[%s0 + $0x8] sm:$0xff]
    %v43 = vld [vmem:[%s0 + $0x10] sm:$0xff]
    %v44 = vld [vmem:[%s0 + $0x18] sm:$0xff]
    %v45 = vld [vmem:[%s0 + $0x20] sm:$0xff]
    %v46 = vld [vmem:[%s0 + $0x28] sm:$0xff]
    %v47 = vld [vmem:[%s0 + $0x30] sm:$0xff]
    %v48 = vld [vmem:[%s0 + $0x38] sm:$0xff]
    %49 = vst [vmem:[#allocation2] sm:$0xff] 0.0
    %50 = vst [vmem:[#allocation2 + $0x8] sm:$0xff] 0.0
    %51 = vst [vmem:[#allocation2 + $0x10] sm:$0xff] 0.0
    %52 = vst [vmem:[#allocation2 + $0x18] sm:$0xff] 0.0
    %53 = vst [vmem:[#allocation2 + $0x20] sm:$0xff] 0.0
    %54 = vst [vmem:[#allocation2 + $0x28] sm:$0xff] 0.0
    %55 = vst [vmem:[#allocation2 + $0x30] sm:$0xff] 0.0
    %56 = vst [vmem:[#allocation2 + $0x38] sm:$0xff] 0.0
    %57 = vst [vmem:[#allocation2 + $0x40] sm:$0xff] 0.0
    %58 = vst [vmem:[#allocation2 + $0x48] sm:$0xff] 0.0
    %59 = vst [vmem:[#allocation2 + $0x50] sm:$0xff] 0.0
    %60 = vst [vmem:[#allocation2 + $0x58] sm:$0xff] 0.0
    %61 = vst [vmem:[#allocation2 + $0x60] sm:$0xff] 0.0
    %62 = vst [vmem:[#allocation2 + $0x68] sm:$0xff] 0.0
    %63 = vst [vmem:[#allocation2 + $0x70] sm:$0xff] 0.0
    %64 = vst [vmem:[#allocation2 + $0x78] sm:$0xff] 0.0
    %65 = vst [vmem:[#allocation2 + $0x80] sm:$0xff] 0.0
    %66 = vst [vmem:[#allocation2 + $0x88] sm:$0xff] 0.0
    %67 = vst [vmem:[#allocation2 + $0x90] sm:$0xff] 0.0
    %68 = vst [vmem:[#allocation2 + $0x98] sm:$0xff] 0.0
    %69 = vst [vmem:[#allocation2 + $0xa0] sm:$0xff] 0.0
    %70 = vst [vmem:[#allocation2 + $0xa8] sm:$0xff] 0.0
    %71 = vst [vmem:[#allocation2 + $0xb0] sm:$0xff] 0.0
    %72 = vst [vmem:[#allocation2 + $0xb8] sm:$0xff] 0.0
    %73 = vst [vmem:[#allocation2 + $0xc0] sm:$0xff] 0.0
    %74 = vst [vmem:[#allocation2 + $0xc8] sm:$0xff] 0.0
    %75 = vst [vmem:[#allocation2 + $0xd0] sm:$0xff] 0.0
    %76 = vst [vmem:[#allocation2 + $0xd8] sm:$0xff] 0.0
    %77 = vst [vmem:[#allocation2 + $0xe0] sm:$0xff] 0.0
    %78 = vst [vmem:[#allocation2 + $0xe8] sm:$0xff] 0.0
    %79 = vst [vmem:[#allocation2 + $0xf0] sm:$0xff] 0.0
    %80 = vst [vmem:[#allocation2 + $0xf8] sm:$0xff] 0.0
    %vm81 = vcmask 261120
    %82 = vst.msk [vmem:[#allocation2] sm:$0xff] %vm81, %v41
    %83 = vst.msk [vmem:[#allocation2 + $0x8] sm:$0xff] %vm81, %v42
    %84 = vst.msk [vmem:[#allocation2 + $0x10] sm:$0xff] %vm81, %v43
    %85 = vst.msk [vmem:[#allocation2 + $0x18] sm:$0xff] %vm81, %v44
    %86 = vst.msk [vmem:[#allocation2 + $0x20] sm:$0xff] %vm81, %v45
    %87 = vst.msk [vmem:[#allocation2 + $0x28] sm:$0xff] %vm81, %v46
    %88 = vst.msk [vmem:[#allocation2 + $0x30] sm:$0xff] %vm81, %v47
    %89 = vst.msk [vmem:[#allocation2 + $0x38] sm:$0xff] %vm81, %v48
    %98 = vrot.lane.b32.xlu0 %v41, 32
    %v99 = vpop.permute.xlu0 %98
    %100 = vrot.lane.b32.xlu0 %v42, 32
    %v101 = vpop.permute.xlu0 %100
    %102 = vrot.lane.b32.xlu0 %v43, 32
    %v103 = vpop.permute.xlu0 %102
    %104 = vrot.lane.b32.xlu0 %v44, 32
    %v105 = vpop.permute.xlu0 %104
    %106 = vrot.lane.b32.xlu0 %v45, 32
    %v107 = vpop.permute.xlu0 %106
    %108 = vrot.lane.b32.xlu0 %v46, 32
    %v109 = vpop.permute.xlu0 %108
    %110 = vrot.lane.b32.xlu0 %v47, 32
    %v111 = vpop.permute.xlu0 %110
    %112 = vrot.lane.b32.xlu0 %v48, 32
    %v113 = vpop.permute.xlu0 %112
    %vm122 = vcmask 523520
    %123 = vst.msk [vmem:[#allocation2 + $0x40] sm:$0xff] %vm122, %v99
    %124 = vst.msk [vmem:[#allocation2 + $0x48] sm:$0xff] %vm122, %v101
    %125 = vst.msk [vmem:[#allocation2 + $0x50] sm:$0xff] %vm122, %v103
    %126 = vst.msk [vmem:[#allocation2 + $0x58] sm:$0xff] %vm122, %v105
    %127 = vst.msk [vmem:[#allocation2 + $0x60] sm:$0xff] %vm122, %v107
    %128 = vst.msk [vmem:[#allocation2 + $0x68] sm:$0xff] %vm122, %v109
    %129 = vst.msk [vmem:[#allocation2 + $0x70] sm:$0xff] %vm122, %v111
    %130 = vst.msk [vmem:[#allocation2 + $0x78] sm:$0xff] %vm122, %v113
    %131 = vrot.lane.b32.xlu0 %v41, 64
    %v132 = vpop.permute.xlu0 %131
    %133 = vrot.lane.b32.xlu0 %v42, 64
    %v134 = vpop.permute.xlu0 %133
    %135 = vrot.lane.b32.xlu0 %v43, 64
    %v136 = vpop.permute.xlu0 %135
    %137 = vrot.lane.b32.xlu0 %v44, 64
    %v138 = vpop.permute.xlu0 %137
    %139 = vrot.lane.b32.xlu0 %v45, 64
    %v140 = vpop.permute.xlu0 %139
    %141 = vrot.lane.b32.xlu0 %v46, 64
    %v142 = vpop.permute.xlu0 %141
    %143 = vrot.lane.b32.xlu0 %v47, 64
    %v144 = vpop.permute.xlu0 %143
    %145 = vrot.lane.b32.xlu0 %v48, 64
    %v146 = vpop.permute.xlu0 %145
    %vm155 = vcmask 785920
    %156 = vst.msk [vmem:[#allocation2 + $0x80] sm:$0xff] %vm155, %v132
    %157 = vst.msk [vmem:[#allocation2 + $0x88] sm:$0xff] %vm155, %v134
    %158 = vst.msk [vmem:[#allocation2 + $0x90] sm:$0xff] %vm155, %v136
    %159 = vst.msk [vmem:[#allocation2 + $0x98] sm:$0xff] %vm155, %v138
    %160 = vst.msk [vmem:[#allocation2 + $0xa0] sm:$0xff] %vm155, %v140
    %161 = vst.msk [vmem:[#allocation2 + $0xa8] sm:$0xff] %vm155, %v142
    %162 = vst.msk [vmem:[#allocation2 + $0xb0] sm:$0xff] %vm155, %v144
    %163 = vst.msk [vmem:[#allocation2 + $0xb8] sm:$0xff] %vm155, %v146
    %164 = vrot.lane.b32.xlu0 %v41, 96
    %v165 = vpop.permute.xlu0 %164
    %166 = vrot.lane.b32.xlu0 %v42, 96
    %v167 = vpop.permute.xlu0 %166
    %168 = vrot.lane.b32.xlu0 %v43, 96
    %v169 = vpop.permute.xlu0 %168
    %170 = vrot.lane.b32.xlu0 %v44, 96
    %v171 = vpop.permute.xlu0 %170
    %172 = vrot.lane.b32.xlu0 %v45, 96
    %v173 = vpop.permute.xlu0 %172
    %174 = vrot.lane.b32.xlu0 %v46, 96
    %v175 = vpop.permute.xlu0 %174
    %176 = vrot.lane.b32.xlu0 %v47, 96
    %v177 = vpop.permute.xlu0 %176
    %178 = vrot.lane.b32.xlu0 %v48, 96
    %v179 = vpop.permute.xlu0 %178
    %vm188 = vcmask 1048320
    %189 = vst.msk [vmem:[#allocation2 + $0xc0] sm:$0xff] %vm188, %v165
    %190 = vst.msk [vmem:[#allocation2 + $0xc8] sm:$0xff] %vm188, %v167
    %191 = vst.msk [vmem:[#allocation2 + $0xd0] sm:$0xff] %vm188, %v169
    %192 = vst.msk [vmem:[#allocation2 + $0xd8] sm:$0xff] %vm188, %v171
    %193 = vst.msk [vmem:[#allocation2 + $0xe0] sm:$0xff] %vm188, %v173
    %194 = vst.msk [vmem:[#allocation2 + $0xe8] sm:$0xff] %vm188, %v175
    %195 = vst.msk [vmem:[#allocation2 + $0xf0] sm:$0xff] %vm188, %v177
    %196 = vst.msk [vmem:[#allocation2 + $0xf8] sm:$0xff] %vm188, %v179
    %v197 = vld [vmem:[%s1] sm:$0xff]
    %v198 = vld [vmem:[%s2] sm:$0xff]
    %v199 = vlaneseq
    %v200 = vand.u32 %v199, 127
    %v201 = vadd.s32 %v200, 128
    %v202 = vlaneseq
    %v203 = vshrl.u32 %v202, 7
    %v204 = vsub.s32 0, %v203
    %v205 = vrot.slane %v197, %v204
    %207 = vbcast.lane.b32.xlu0 %v205, 256
    %v208 = vpop.permute.xlu0 %207
    %s210 = sor.u32 256, 8
    %211 = vbcast.lane.b32.xlu0 %v205, %s210
    %v212 = vpop.permute.xlu0 %211
    %s214 = sor.u32 256, 16
    %215 = vbcast.lane.b32.xlu0 %v205, %s214
    %v216 = vpop.permute.xlu0 %215
    %s218 = sor.u32 256, 24
    %219 = vbcast.lane.b32.xlu0 %v205, %s218
    %v220 = vpop.permute.xlu0 %219
    %v221 = vlaneseq
    %v222 = vshrl.u32 %v221, 7
    %v223 = vsub.s32 1, %v222
    %v224 = vrot.slane %v197, %v223
    %226 = vbcast.lane.b32.xlu0 %v224, 256
    %v227 = vpop.permute.xlu0 %226
    %s229 = sor.u32 256, 8
    %230 = vbcast.lane.b32.xlu0 %v224, %s229
    %v231 = vpop.permute.xlu0 %230
    %s233 = sor.u32 256, 16
    %234 = vbcast.lane.b32.xlu0 %v224, %s233
    %v235 = vpop.permute.xlu0 %234
    %s237 = sor.u32 256, 24
    %238 = vbcast.lane.b32.xlu0 %v224, %s237
    %v239 = vpop.permute.xlu0 %238
    %v240 = vlaneseq
    %v241 = vshrl.u32 %v240, 7
    %v242 = vsub.s32 2, %v241
    %v243 = vrot.slane %v197, %v242
    %245 = vbcast.lane.b32.xlu0 %v243, 256
    %v246 = vpop.permute.xlu0 %245
    %s248 = sor.u32 256, 8
    %249 = vbcast.lane.b32.xlu0 %v243, %s248
    %v250 = vpop.permute.xlu0 %249
    %s252 = sor.u32 256, 16
    %253 = vbcast.lane.b32.xlu0 %v243, %s252
    %v254 = vpop.permute.xlu0 %253
    %s256 = sor.u32 256, 24
    %257 = vbcast.lane.b32.xlu0 %v243, %s256
    %v258 = vpop.permute.xlu0 %257
    %v259 = vlaneseq
    %v260 = vshrl.u32 %v259, 7
    %v261 = vsub.s32 3, %v260
    %v262 = vrot.slane %v197, %v261
    %264 = vbcast.lane.b32.xlu0 %v262, 256
    %v265 = vpop.permute.xlu0 %264
    %s267 = sor.u32 256, 8
    %268 = vbcast.lane.b32.xlu0 %v262, %s267
    %v269 = vpop.permute.xlu0 %268
    %s271 = sor.u32 256, 16
    %272 = vbcast.lane.b32.xlu0 %v262, %s271
    %v273 = vpop.permute.xlu0 %272
    %s275 = sor.u32 256, 24
    %276 = vbcast.lane.b32.xlu0 %v262, %s275
    %v277 = vpop.permute.xlu0 %276
    %v278 = vlaneseq
    %v279 = vshrl.u32 %v278, 7
    %v280 = vsub.s32 4, %v279
    %v281 = vrot.slane %v197, %v280
    %283 = vbcast.lane.b32.xlu0 %v281, 256
    %v284 = vpop.permute.xlu0 %283
    %s286 = sor.u32 256, 8
    %287 = vbcast.lane.b32.xlu0 %v281, %s286
    %v288 = vpop.permute.xlu0 %287
    %s290 = sor.u32 256, 16
    %291 = vbcast.lane.b32.xlu0 %v281, %s290
    %v292 = vpop.permute.xlu0 %291
    %s294 = sor.u32 256, 24
    %295 = vbcast.lane.b32.xlu0 %v281, %s294
    %v296 = vpop.permute.xlu0 %295
    %v297 = vlaneseq
    %v298 = vshrl.u32 %v297, 7
    %v299 = vsub.s32 5, %v298
    %v300 = vrot.slane %v197, %v299
    %302 = vbcast.lane.b32.xlu0 %v300, 256
    %v303 = vpop.permute.xlu0 %302
    %s305 = sor.u32 256, 8
    %306 = vbcast.lane.b32.xlu0 %v300, %s305
    %v307 = vpop.permute.xlu0 %306
    %s309 = sor.u32 256, 16
    %310 = vbcast.lane.b32.xlu0 %v300, %s309
    %v311 = vpop.permute.xlu0 %310
    %s313 = sor.u32 256, 24
    %314 = vbcast.lane.b32.xlu0 %v300, %s313
    %v315 = vpop.permute.xlu0 %314
    %v316 = vlaneseq
    %v317 = vshrl.u32 %v316, 7
    %v318 = vsub.s32 6, %v317
    %v319 = vrot.slane %v197, %v318
    %321 = vbcast.lane.b32.xlu0 %v319, 256
    %v322 = vpop.permute.xlu0 %321
    %s324 = sor.u32 256, 8
    %325 = vbcast.lane.b32.xlu0 %v319, %s324
    %v326 = vpop.permute.xlu0 %325
    %s328 = sor.u32 256, 16
    %329 = vbcast.lane.b32.xlu0 %v319, %s328
    %v330 = vpop.permute.xlu0 %329
    %s332 = sor.u32 256, 24
    %333 = vbcast.lane.b32.xlu0 %v319, %s332
    %v334 = vpop.permute.xlu0 %333
    %v335 = vlaneseq
    %v336 = vshrl.u32 %v335, 7
    %v337 = vsub.s32 7, %v336
    %v338 = vrot.slane %v197, %v337
    %340 = vbcast.lane.b32.xlu0 %v338, 256
    %v341 = vpop.permute.xlu0 %340
    %s343 = sor.u32 256, 8
    %344 = vbcast.lane.b32.xlu0 %v338, %s343
    %v345 = vpop.permute.xlu0 %344
    %s347 = sor.u32 256, 16
    %348 = vbcast.lane.b32.xlu0 %v338, %s347
    %v349 = vpop.permute.xlu0 %348
    %s351 = sor.u32 256, 24
    %352 = vbcast.lane.b32.xlu0 %v338, %s351
    %v353 = vpop.permute.xlu0 %352
    %vm354 = vcmp.eq.s32.totalorder %v208, %v200
    %vm355 = vcmp.eq.s32.totalorder %v208, %v201
    %vm356 = vcmp.eq.s32.totalorder %v212, %v200
    %vm357 = vcmp.eq.s32.totalorder %v212, %v201
    %vm358 = vcmp.eq.s32.totalorder %v216, %v200
    %vm359 = vcmp.eq.s32.totalorder %v216, %v201
    %vm360 = vcmp.eq.s32.totalorder %v220, %v200
    %vm361 = vcmp.eq.s32.totalorder %v220, %v201
    %vm362 = vcmp.eq.s32.totalorder %v227, %v200
    %vm363 = vcmp.eq.s32.totalorder %v227, %v201
    %vm364 = vcmp.eq.s32.totalorder %v231, %v200
    %vm365 = vcmp.eq.s32.totalorder %v231, %v201
    %vm366 = vcmp.eq.s32.totalorder %v235, %v200
    %vm367 = vcmp.eq.s32.totalorder %v235, %v201
    %vm368 = vcmp.eq.s32.totalorder %v239, %v200
    %vm369 = vcmp.eq.s32.totalorder %v239, %v201
    %vm370 = vcmp.eq.s32.totalorder %v246, %v200
    %vm371 = vcmp.eq.s32.totalorder %v246, %v201
    %vm372 = vcmp.eq.s32.totalorder %v250, %v200
    %vm373 = vcmp.eq.s32.totalorder %v250, %v201
    %vm374 = vcmp.eq.s32.totalorder %v254, %v200
    %vm375 = vcmp.eq.s32.totalorder %v254, %v201
    %vm376 = vcmp.eq.s32.totalorder %v258, %v200
    %vm377 = vcmp.eq.s32.totalorder %v258, %v201
    %vm378 = vcmp.eq.s32.totalorder %v265, %v200
    %vm379 = vcmp.eq.s32.totalorder %v265, %v201
    %vm380 = vcmp.eq.s32.totalorder %v269, %v200
    %vm381 = vcmp.eq.s32.totalorder %v269, %v201
    %vm382 = vcmp.eq.s32.totalorder %v273, %v200
    %vm383 = vcmp.eq.s32.totalorder %v273, %v201
    %vm384 = vcmp.eq.s32.totalorder %v277, %v200
    %vm385 = vcmp.eq.s32.totalorder %v277, %v201
    %vm386 = vcmp.eq.s32.totalorder %v284, %v200
    %vm387 = vcmp.eq.s32.totalorder %v284, %v201
    %vm388 = vcmp.eq.s32.totalorder %v288, %v200
    %vm389 = vcmp.eq.s32.totalorder %v288, %v201
    %vm390 = vcmp.eq.s32.totalorder %v292, %v200
    %vm391 = vcmp.eq.s32.totalorder %v292, %v201
    %vm392 = vcmp.eq.s32.totalorder %v296, %v200
    %vm393 = vcmp.eq.s32.totalorder %v296, %v201
    %vm394 = vcmp.eq.s32.totalorder %v303, %v200
    %vm395 = vcmp.eq.s32.totalorder %v303, %v201
    %vm396 = vcmp.eq.s32.totalorder %v307, %v200
    %vm397 = vcmp.eq.s32.totalorder %v307, %v201
    %vm398 = vcmp.eq.s32.totalorder %v311, %v200
    %vm399 = vcmp.eq.s32.totalorder %v311, %v201
    %vm400 = vcmp.eq.s32.totalorder %v315, %v200
    %vm401 = vcmp.eq.s32.totalorder %v315, %v201
    %vm402 = vcmp.eq.s32.totalorder %v322, %v200
    %vm403 = vcmp.eq.s32.totalorder %v322, %v201
    %vm404 = vcmp.eq.s32.totalorder %v326, %v200
    %vm405 = vcmp.eq.s32.totalorder %v326, %v201
    %vm406 = vcmp.eq.s32.totalorder %v330, %v200
    %vm407 = vcmp.eq.s32.totalorder %v330, %v201
    %vm408 = vcmp.eq.s32.totalorder %v334, %v200
    %vm409 = vcmp.eq.s32.totalorder %v334, %v201
    %vm410 = vcmp.eq.s32.totalorder %v341, %v200
    %vm411 = vcmp.eq.s32.totalorder %v341, %v201
    %vm412 = vcmp.eq.s32.totalorder %v345, %v200
    %vm413 = vcmp.eq.s32.totalorder %v345, %v201
    %vm414 = vcmp.eq.s32.totalorder %v349, %v200
    %vm415 = vcmp.eq.s32.totalorder %v349, %v201
    %vm416 = vcmp.eq.s32.totalorder %v353, %v200
    %vm417 = vcmp.eq.s32.totalorder %v353, %v201
    %v418 = vlaneseq
    %v419 = vshrl.u32 %v418, 7
    %v420 = vsub.s32 0, %v419
    %v421 = vrot.slane %v198, %v420
    %423 = vbcast.lane.b32.xlu0 %v421, 256
    %v424 = vpop.permute.xlu0 %423
    %s426 = sor.u32 256, 8
    %427 = vbcast.lane.b32.xlu0 %v421, %s426
    %v428 = vpop.permute.xlu0 %427
    %s430 = sor.u32 256, 16
    %431 = vbcast.lane.b32.xlu0 %v421, %s430
    %v432 = vpop.permute.xlu0 %431
    %s434 = sor.u32 256, 24
    %435 = vbcast.lane.b32.xlu0 %v421, %s434
    %v436 = vpop.permute.xlu0 %435
    %v437 = vlaneseq
    %v438 = vshrl.u32 %v437, 7
    %v439 = vsub.s32 1, %v438
    %v440 = vrot.slane %v198, %v439
    %442 = vbcast.lane.b32.xlu0 %v440, 256
    %v443 = vpop.permute.xlu0 %442
    %s445 = sor.u32 256, 8
    %446 = vbcast.lane.b32.xlu0 %v440, %s445
    %v447 = vpop.permute.xlu0 %446
    %s449 = sor.u32 256, 16
    %450 = vbcast.lane.b32.xlu0 %v440, %s449
    %v451 = vpop.permute.xlu0 %450
    %s453 = sor.u32 256, 24
    %454 = vbcast.lane.b32.xlu0 %v440, %s453
    %v455 = vpop.permute.xlu0 %454
    %v456 = vlaneseq
    %v457 = vshrl.u32 %v456, 7
    %v458 = vsub.s32 2, %v457
    %v459 = vrot.slane %v198, %v458
    %461 = vbcast.lane.b32.xlu0 %v459, 256
    %v462 = vpop.permute.xlu0 %461
    %s464 = sor.u32 256, 8
    %465 = vbcast.lane.b32.xlu0 %v459, %s464
    %v466 = vpop.permute.xlu0 %465
    %s468 = sor.u32 256, 16
    %469 = vbcast.lane.b32.xlu0 %v459, %s468
    %v470 = vpop.permute.xlu0 %469
    %s472 = sor.u32 256, 24
    %473 = vbcast.lane.b32.xlu0 %v459, %s472
    %v474 = vpop.permute.xlu0 %473
    %v475 = vlaneseq
    %v476 = vshrl.u32 %v475, 7
    %v477 = vsub.s32 3, %v476
    %v478 = vrot.slane %v198, %v477
    %480 = vbcast.lane.b32.xlu0 %v478, 256
    %v481 = vpop.permute.xlu0 %480
    %s483 = sor.u32 256, 8
    %484 = vbcast.lane.b32.xlu0 %v478, %s483
    %v485 = vpop.permute.xlu0 %484
    %s487 = sor.u32 256, 16
    %488 = vbcast.lane.b32.xlu0 %v478, %s487
    %v489 = vpop.permute.xlu0 %488
    %s491 = sor.u32 256, 24
    %492 = vbcast.lane.b32.xlu0 %v478, %s491
    %v493 = vpop.permute.xlu0 %492
    %v494 = vlaneseq
    %v495 = vshrl.u32 %v494, 7
    %v496 = vsub.s32 4, %v495
    %v497 = vrot.slane %v198, %v496
    %499 = vbcast.lane.b32.xlu0 %v497, 256
    %v500 = vpop.permute.xlu0 %499
    %s502 = sor.u32 256, 8
    %503 = vbcast.lane.b32.xlu0 %v497, %s502
    %v504 = vpop.permute.xlu0 %503
    %s506 = sor.u32 256, 16
    %507 = vbcast.lane.b32.xlu0 %v497, %s506
    %v508 = vpop.permute.xlu0 %507
    %s510 = sor.u32 256, 24
    %511 = vbcast.lane.b32.xlu0 %v497, %s510
    %v512 = vpop.permute.xlu0 %511
    %v513 = vlaneseq
    %v514 = vshrl.u32 %v513, 7
    %v515 = vsub.s32 5, %v514
    %v516 = vrot.slane %v198, %v515
    %518 = vbcast.lane.b32.xlu0 %v516, 256
    %v519 = vpop.permute.xlu0 %518
    %s521 = sor.u32 256, 8
    %522 = vbcast.lane.b32.xlu0 %v516, %s521
    %v523 = vpop.permute.xlu0 %522
    %s525 = sor.u32 256, 16
    %526 = vbcast.lane.b32.xlu0 %v516, %s525
    %v527 = vpop.permute.xlu0 %526
    %s529 = sor.u32 256, 24
    %530 = vbcast.lane.b32.xlu0 %v516, %s529
    %v531 = vpop.permute.xlu0 %530
    %v532 = vlaneseq
    %v533 = vshrl.u32 %v532, 7
    %v534 = vsub.s32 6, %v533
    %v535 = vrot.slane %v198, %v534
    %537 = vbcast.lane.b32.xlu0 %v535, 256
    %v538 = vpop.permute.xlu0 %537
    %s540 = sor.u32 256, 8
    %541 = vbcast.lane.b32.xlu0 %v535, %s540
    %v542 = vpop.permute.xlu0 %541
    %s544 = sor.u32 256, 16
    %545 = vbcast.lane.b32.xlu0 %v535, %s544
    %v546 = vpop.permute.xlu0 %545
    %s548 = sor.u32 256, 24
    %549 = vbcast.lane.b32.xlu0 %v535, %s548
    %v550 = vpop.permute.xlu0 %549
    %v551 = vlaneseq
    %v552 = vshrl.u32 %v551, 7
    %v553 = vsub.s32 7, %v552
    %v554 = vrot.slane %v198, %v553
    %556 = vbcast.lane.b32.xlu0 %v554, 256
    %v557 = vpop.permute.xlu0 %556
    %s559 = sor.u32 256, 8
    %560 = vbcast.lane.b32.xlu0 %v554, %s559
    %v561 = vpop.permute.xlu0 %560
    %s563 = sor.u32 256, 16
    %564 = vbcast.lane.b32.xlu0 %v554, %s563
    %v565 = vpop.permute.xlu0 %564
    %s567 = sor.u32 256, 24
    %568 = vbcast.lane.b32.xlu0 %v554, %s567
    %v569 = vpop.permute.xlu0 %568
    %v570 = vsel %vm354, %v424, 0.0
    %v571 = vsel %vm355, %v424, 0.0
    %v572 = vsel %vm356, %v428, 0.0
    %v573 = vsel %vm357, %v428, 0.0
    %v574 = vsel %vm358, %v432, 0.0
    %v575 = vsel %vm359, %v432, 0.0
    %v576 = vsel %vm360, %v436, 0.0
    %v577 = vsel %vm361, %v436, 0.0
    %v578 = vsel %vm362, %v443, 0.0
    %v579 = vsel %vm363, %v443, 0.0
    %v580 = vsel %vm364, %v447, 0.0
    %v581 = vsel %vm365, %v447, 0.0
    %v582 = vsel %vm366, %v451, 0.0
    %v583 = vsel %vm367, %v451, 0.0
    %v584 = vsel %vm368, %v455, 0.0
    %v585 = vsel %vm369, %v455, 0.0
    %v586 = vsel %vm370, %v462, 0.0
    %v587 = vsel %vm371, %v462, 0.0
    %v588 = vsel %vm372, %v466, 0.0
    %v589 = vsel %vm373, %v466, 0.0
    %v590 = vsel %vm374, %v470, 0.0
    %v591 = vsel %vm375, %v470, 0.0
    %v592 = vsel %vm376, %v474, 0.0
    %v593 = vsel %vm377, %v474, 0.0
    %v594 = vsel %vm378, %v481, 0.0
    %v595 = vsel %vm379, %v481, 0.0
    %v596 = vsel %vm380, %v485, 0.0
    %v597 = vsel %vm381, %v485, 0.0
    %v598 = vsel %vm382, %v489, 0.0
    %v599 = vsel %vm383, %v489, 0.0
    %v600 = vsel %vm384, %v493, 0.0
    %v601 = vsel %vm385, %v493, 0.0
    %v602 = vsel %vm386, %v500, 0.0
    %v603 = vsel %vm387, %v500, 0.0
    %v604 = vsel %vm388, %v504, 0.0
    %v605 = vsel %vm389, %v504, 0.0
    %v606 = vsel %vm390, %v508, 0.0
    %v607 = vsel %vm391, %v508, 0.0
    %v608 = vsel %vm392, %v512, 0.0
    %v609 = vsel %vm393, %v512, 0.0
    %v610 = vsel %vm394, %v519, 0.0
    %v611 = vsel %vm395, %v519, 0.0
    %v612 = vsel %vm396, %v523, 0.0
    %v613 = vsel %vm397, %v523, 0.0
    %v614 = vsel %vm398, %v527, 0.0
    %v615 = vsel %vm399, %v527, 0.0
    %v616 = vsel %vm400, %v531, 0.0
    %v617 = vsel %vm401, %v531, 0.0
    %v618 = vsel %vm402, %v538, 0.0
    %v619 = vsel %vm403, %v538, 0.0
    %v620 = vsel %vm404, %v542, 0.0
    %v621 = vsel %vm405, %v542, 0.0
    %v622 = vsel %vm406, %v546, 0.0
    %v623 = vsel %vm407, %v546, 0.0
    %v624 = vsel %vm408, %v550, 0.0
    %v625 = vsel %vm409, %v550, 0.0
    %v626 = vsel %vm410, %v557, 0.0
    %v627 = vsel %vm411, %v557, 0.0
    %v628 = vsel %vm412, %v561, 0.0
    %v629 = vsel %vm413, %v561, 0.0
    %v630 = vsel %vm414, %v565, 0.0
    %v631 = vsel %vm415, %v565, 0.0
    %v632 = vsel %vm416, %v569, 0.0
    %v633 = vsel %vm417, %v569, 0.0
    %v634 = vadd.f32 %v570, %v572
    %v635 = vadd.f32 %v634, %v574
    %vm636 = vcmask 1040384
    %v637 = vsel %vm636, %v576, 0.0
    %v638 = vadd.f32 %v635, %v637
    %v639 = vrot.slane %v638, 4
    %v640 = vadd.f32 %v638, %v639
    %v641 = vrot.slane %v640, 2
    %v642 = vadd.f32 %v640, %v641
    %v643 = vrot.slane %v642, 1
    %v644 = vadd.f32 %v642, %v643
    %v645 = vadd.f32 %v571, %v573
    %v646 = vadd.f32 %v645, %v575
    %v647 = vsel %vm636, %v577, 0.0
    %v648 = vadd.f32 %v646, %v647
    %v649 = vrot.slane %v648, 4
    %v650 = vadd.f32 %v648, %v649
    %v651 = vrot.slane %v650, 2
    %v652 = vadd.f32 %v650, %v651
    %v653 = vrot.slane %v652, 1
    %v654 = vadd.f32 %v652, %v653
    %v655 = vadd.f32 %v578, %v580
    %v656 = vadd.f32 %v655, %v582
    %v657 = vsel %vm636, %v584, 0.0
    %v658 = vadd.f32 %v656, %v657
    %v659 = vrot.slane %v658, 4
    %v660 = vadd.f32 %v658, %v659
    %v661 = vrot.slane %v660, 2
    %v662 = vadd.f32 %v660, %v661
    %v663 = vrot.slane %v662, 1
    %v664 = vadd.f32 %v662, %v663
    %v665 = vadd.f32 %v579, %v581
    %v666 = vadd.f32 %v665, %v583
    %v667 = vsel %vm636, %v585, 0.0
    %v668 = vadd.f32 %v666, %v667
    %v669 = vrot.slane %v668, 4
    %v670 = vadd.f32 %v668, %v669
    %v671 = vrot.slane %v670, 2
    %v672 = vadd.f32 %v670, %v671
    %v673 = vrot.slane %v672, 1
    %v674 = vadd.f32 %v672, %v673
    %v675 = vadd.f32 %v586, %v588
    %v676 = vadd.f32 %v675, %v590
    %v677 = vsel %vm636, %v592, 0.0
    %v678 = vadd.f32 %v676, %v677
    %v679 = vrot.slane %v678, 4
    %v680 = vadd.f32 %v678, %v679
    %v681 = vrot.slane %v680, 2
    %v682 = vadd.f32 %v680, %v681
    %v683 = vrot.slane %v682, 1
    %v684 = vadd.f32 %v682, %v683
    %v685 = vadd.f32 %v587, %v589
    %v686 = vadd.f32 %v685, %v591
    %v687 = vsel %vm636, %v593, 0.0
    %v688 = vadd.f32 %v686, %v687
    %v689 = vrot.slane %v688, 4
    %v690 = vadd.f32 %v688, %v689
    %v691 = vrot.slane %v690, 2
    %v692 = vadd.f32 %v690, %v691
    %v693 = vrot.slane %v692, 1
    %v694 = vadd.f32 %v692, %v693
    %v695 = vadd.f32 %v594, %v596
    %v696 = vadd.f32 %v695, %v598
    %v697 = vsel %vm636, %v600, 0.0
    %v698 = vadd.f32 %v696, %v697
    %v699 = vrot.slane %v698, 4
    %v700 = vadd.f32 %v698, %v699
    %v701 = vrot.slane %v700, 2
    %v702 = vadd.f32 %v700, %v701
    %v703 = vrot.slane %v702, 1
    %v704 = vadd.f32 %v702, %v703
    %v705 = vadd.f32 %v595, %v597
    %v706 = vadd.f32 %v705, %v599
    %v707 = vsel %vm636, %v601, 0.0
    %v708 = vadd.f32 %v706, %v707
    %v709 = vrot.slane %v708, 4
    %v710 = vadd.f32 %v708, %v709
    %v711 = vrot.slane %v710, 2
    %v712 = vadd.f32 %v710, %v711
    %v713 = vrot.slane %v712, 1
    %v714 = vadd.f32 %v712, %v713
    %v715 = vadd.f32 %v602, %v604
    %v716 = vadd.f32 %v715, %v606
    %v717 = vsel %vm636, %v608, 0.0
    %v718 = vadd.f32 %v716, %v717
    %v719 = vrot.slane %v718, 4
    %v720 = vadd.f32 %v718, %v719
    %v721 = vrot.slane %v720, 2
    %v722 = vadd.f32 %v720, %v721
    %v723 = vrot.slane %v722, 1
    %v724 = vadd.f32 %v722, %v723
    %v725 = vadd.f32 %v603, %v605
    %v726 = vadd.f32 %v725, %v607
    %v727 = vsel %vm636, %v609, 0.0
    %v728 = vadd.f32 %v726, %v727
    %v729 = vrot.slane %v728, 4
    %v730 = vadd.f32 %v728, %v729
    %v731 = vrot.slane %v730, 2
    %v732 = vadd.f32 %v730, %v731
    %v733 = vrot.slane %v732, 1
    %v734 = vadd.f32 %v732, %v733
    %v735 = vadd.f32 %v610, %v612
    %v736 = vadd.f32 %v735, %v614
    %v737 = vsel %vm636, %v616, 0.0
    %v738 = vadd.f32 %v736, %v737
    %v739 = vrot.slane %v738, 4
    %v740 = vadd.f32 %v738, %v739
    %v741 = vrot.slane %v740, 2
    %v742 = vadd.f32 %v740, %v741
    %v743 = vrot.slane %v742, 1
    %v744 = vadd.f32 %v742, %v743
    %v745 = vadd.f32 %v611, %v613
    %v746 = vadd.f32 %v745, %v615
    %v747 = vsel %vm636, %v617, 0.0
    %v748 = vadd.f32 %v746, %v747
    %v749 = vrot.slane %v748, 4
    %v750 = vadd.f32 %v748, %v749
    %v751 = vrot.slane %v750, 2
    %v752 = vadd.f32 %v750, %v751
    %v753 = vrot.slane %v752, 1
    %v754 = vadd.f32 %v752, %v753
    %v755 = vadd.f32 %v618, %v620
    %v756 = vadd.f32 %v755, %v622
    %v757 = vsel %vm636, %v624, 0.0
    %v758 = vadd.f32 %v756, %v757
    %v759 = vrot.slane %v758, 4
    %v760 = vadd.f32 %v758, %v759
    %v761 = vrot.slane %v760, 2
    %v762 = vadd.f32 %v760, %v761
    %v763 = vrot.slane %v762, 1
    %v764 = vadd.f32 %v762, %v763
    %v765 = vadd.f32 %v619, %v621
    %v766 = vadd.f32 %v765, %v623
    %v767 = vsel %vm636, %v625, 0.0
    %v768 = vadd.f32 %v766, %v767
    %v769 = vrot.slane %v768, 4
    %v770 = vadd.f32 %v768, %v769
    %v771 = vrot.slane %v770, 2
    %v772 = vadd.f32 %v770, %v771
    %v773 = vrot.slane %v772, 1
    %v774 = vadd.f32 %v772, %v773
    %v775 = vadd.f32 %v626, %v628
    %v776 = vadd.f32 %v775, %v630
    %v777 = vsel %vm636, %v632, 0.0
    %v778 = vadd.f32 %v776, %v777
    %v779 = vrot.slane %v778, 4
    %v780 = vadd.f32 %v778, %v779
    %v781 = vrot.slane %v780, 2
    %v782 = vadd.f32 %v780, %v781
    %v783 = vrot.slane %v782, 1
    %v784 = vadd.f32 %v782, %v783
    %v785 = vadd.f32 %v627, %v629
    %v786 = vadd.f32 %v785, %v631
    %v787 = vsel %vm636, %v633, 0.0
    %v788 = vadd.f32 %v786, %v787
    %v789 = vrot.slane %v788, 4
    %v790 = vadd.f32 %v788, %v789
    %v791 = vrot.slane %v790, 2
    %v792 = vadd.f32 %v790, %v791
    %v793 = vrot.slane %v792, 1
    %v794 = vadd.f32 %v792, %v793
    %v795 = vld [vmem:[#allocation2] sm:$0xff]
    %v796 = vld [vmem:[#allocation2 + $0x8] sm:$0xff]
    %v797 = vld [vmem:[#allocation2 + $0x10] sm:$0xff]
    %v798 = vld [vmem:[#allocation2 + $0x18] sm:$0xff]
    %v799 = vld [vmem:[#allocation2 + $0x20] sm:$0xff]
    %v800 = vld [vmem:[#allocation2 + $0x28] sm:$0xff]
    %v801 = vld [vmem:[#allocation2 + $0x30] sm:$0xff]
    %v802 = vld [vmem:[#allocation2 + $0x38] sm:$0xff]
    %v803 = vld [vmem:[#allocation2 + $0x40] sm:$0xff]
    %v804 = vld [vmem:[#allocation2 + $0x48] sm:$0xff]
    %v805 = vld [vmem:[#allocation2 + $0x50] sm:$0xff]
    %v806 = vld [vmem:[#allocation2 + $0x58] sm:$0xff]
    %v807 = vld [vmem:[#allocation2 + $0x60] sm:$0xff]
    %v808 = vld [vmem:[#allocation2 + $0x68] sm:$0xff]
    %v809 = vld [vmem:[#allocation2 + $0x70] sm:$0xff]
    %v810 = vld [vmem:[#allocation2 + $0x78] sm:$0xff]
    %v811 = vld [vmem:[#allocation2 + $0x80] sm:$0xff]
    %v812 = vld [vmem:[#allocation2 + $0x88] sm:$0xff]
    %v813 = vld [vmem:[#allocation2 + $0x90] sm:$0xff]
    %v814 = vld [vmem:[#allocation2 + $0x98] sm:$0xff]
    %v815 = vld [vmem:[#allocation2 + $0xa0] sm:$0xff]
    %v816 = vld [vmem:[#allocation2 + $0xa8] sm:$0xff]
    %v817 = vld [vmem:[#allocation2 + $0xb0] sm:$0xff]
    %v818 = vld [vmem:[#allocation2 + $0xb8] sm:$0xff]
    %v819 = vld [vmem:[#allocation2 + $0xc0] sm:$0xff]
    %v820 = vld [vmem:[#allocation2 + $0xc8] sm:$0xff]
    %v821 = vld [vmem:[#allocation2 + $0xd0] sm:$0xff]
    %v822 = vld [vmem:[#allocation2 + $0xd8] sm:$0xff]
    %v823 = vld [vmem:[#allocation2 + $0xe0] sm:$0xff]
    %v824 = vld [vmem:[#allocation2 + $0xe8] sm:$0xff]
    %v825 = vld [vmem:[#allocation2 + $0xf0] sm:$0xff]
    %v826 = vld [vmem:[#allocation2 + $0xf8] sm:$0xff]
    %vm843 = vcmask 1041409
    %v844 = vsel %vm843, %v664, %v644
    %vm845 = vcmask 1042434
    %v846 = vsel %vm845, %v684, %v844
    %vm847 = vcmask 1043459
    %v848 = vsel %vm847, %v704, %v846
    %vm849 = vcmask 1044484
    %v850 = vsel %vm849, %v724, %v848
    %vm851 = vcmask 1045509
    %v852 = vsel %vm851, %v744, %v850
    %vm853 = vcmask 1046534
    %v854 = vsel %vm853, %v764, %v852
    %vm855 = vcmask 1047559
    %v856 = vsel %vm855, %v784, %v854
    %v857 = vsel %vm843, %v674, %v654
    %v858 = vsel %vm845, %v694, %v857
    %v859 = vsel %vm847, %v714, %v858
    %v860 = vsel %vm849, %v734, %v859
    %v861 = vsel %vm851, %v754, %v860
    %v862 = vsel %vm853, %v774, %v861
    %v863 = vsel %vm855, %v794, %v862
    %866 = vmatprep.subr.mxu0 0.0
    %867 = vmatpush1.msra.mxu0 %v795
    %868 = vmatprep.subr.mxu0 0.0
    %869 = vmatpush1.msra.mxu0 %v796
    %870 = vmatprep.subr.mxu0 0.0
    %871 = vmatpush1.msra.mxu0 %v797
    %872 = vmatprep.subr.mxu0 0.0
    %873 = vmatpush1.msra.mxu0 %v798
    %874 = vmatprep.subr.mxu0 0.0
    %875 = vmatpush1.msra.mxu0 %v799
    %876 = vmatprep.subr.mxu0 0.0
    %877 = vmatpush1.msra.mxu0 %v800
    %878 = vmatprep.subr.mxu0 0.0
    %879 = vmatpush1.msra.mxu0 %v801
    %880 = vmatprep.subr.mxu0 0.0
    %881 = vmatpush1.msra.mxu0 %v802
    %882 = vmatprep.subr.mxu0 0.0
    %883 = vmatpush1.msra.mxu0 %v803
    %884 = vmatprep.subr.mxu0 0.0
    %885 = vmatpush1.msra.mxu0 %v804
    %886 = vmatprep.subr.mxu0 0.0
    %887 = vmatpush1.msra.mxu0 %v805
    %888 = vmatprep.subr.mxu0 0.0
    %889 = vmatpush1.msra.mxu0 %v806
    %890 = vmatprep.subr.mxu0 0.0
    %891 = vmatpush1.msra.mxu0 %v807
    %892 = vmatprep.subr.mxu0 0.0
    %893 = vmatpush1.msra.mxu0 %v808
    %894 = vmatprep.subr.mxu0 0.0
    %895 = vmatpush1.msra.mxu0 %v809
    %896 = vmatprep.subr.mxu0 0.0
    %897 = vmatpush1.msra.mxu0 %v810
    %898 = vmatprep.subr.mxu0 0.0
    %899 = vmatpush1.msra.mxu0 %v811
    %900 = vmatprep.subr.mxu0 0.0
    %901 = vmatpush1.msra.mxu0 %v812
    %902 = vmatprep.subr.mxu0 0.0
    %903 = vmatpush1.msra.mxu0 %v813
    %904 = vmatprep.subr.mxu0 0.0
    %905 = vmatpush1.msra.mxu0 %v814
    %906 = vmatprep.subr.mxu0 0.0
    %907 = vmatpush1.msra.mxu0 %v815
    %908 = vmatprep.subr.mxu0 0.0
    %909 = vmatpush1.msra.mxu0 %v816
    %910 = vmatprep.subr.mxu0 0.0
    %911 = vmatpush1.msra.mxu0 %v817
    %912 = vmatprep.subr.mxu0 0.0
    %913 = vmatpush1.msra.mxu0 %v818
    %914 = vmatprep.subr.mxu0 0.0
    %915 = vmatpush1.msra.mxu0 %v819
    %916 = vmatprep.subr.mxu0 0.0
    %917 = vmatpush1.msra.mxu0 %v820
    %918 = vmatprep.subr.mxu0 0.0
    %919 = vmatpush1.msra.mxu0 %v821
    %920 = vmatprep.subr.mxu0 0.0
    %921 = vmatpush1.msra.mxu0 %v822
    %922 = vmatprep.subr.mxu0 0.0
    %923 = vmatpush1.msra.mxu0 %v823
    %924 = vmatprep.subr.mxu0 0.0
    %925 = vmatpush1.msra.mxu0 %v824
    %926 = vmatprep.subr.mxu0 0.0
    %927 = vmatpush1.msra.mxu0 %v825
    %928 = vmatprep.subr.mxu0 0.0
    %929 = vmatpush1.msra.mxu0 %v826
    %930 = vmatprep.mubr.f32.mxu0 %v863
    %931 = vmatmul.mubr.f32.gmra.mrb[0].mxu0 %v856
    %v932 = vpop.f32.mrb[0].mxu0
    %v933 = vadd.f32 0.0, %v932
    %v934 = vpop.f32.mrb[0].mxu0
    %935 = vdwg.mxu0
    %v936 = vld [vmem:[#allocation3] sm:$0xff]
    %v937 = vld [vmem:[#allocation3 + $0x8] sm:$0xff]
    %v938 = vld [vmem:[#allocation3 + $0x10] sm:$0xff]
    %v939 = vld [vmem:[#allocation3 + $0x18] sm:$0xff]
    %v940 = vld [vmem:[#allocation3 + $0x20] sm:$0xff]
    %v941 = vld [vmem:[#allocation3 + $0x28] sm:$0xff]
    %v942 = vld [vmem:[#allocation3 + $0x30] sm:$0xff]
    %v943 = vld [vmem:[#allocation3 + $0x38] sm:$0xff]
    %v944 = vld [vmem:[#allocation3 + $0x40] sm:$0xff]
    %v945 = vld [vmem:[#allocation3 + $0x48] sm:$0xff]
    %v946 = vld [vmem:[#allocation3 + $0x50] sm:$0xff]
    %v947 = vld [vmem:[#allocation3 + $0x58] sm:$0xff]
    %v948 = vld [vmem:[#allocation3 + $0x60] sm:$0xff]
    %v949 = vld [vmem:[#allocation3 + $0x68] sm:$0xff]
    %v950 = vld [vmem:[#allocation3 + $0x70] sm:$0xff]
    %v951 = vld [vmem:[#allocation3 + $0x78] sm:$0xff]
    %952 = vmatprep.subr.mxu0 0.0
    %953 = vmatpush1.msra.mxu0 %v936
    %954 = vmatprep.subr.mxu0 0.0
    %955 = vmatpush1.msra.mxu0 %v937
    %956 = vmatprep.subr.mxu0 0.0
    %957 = vmatpush1.msra.mxu0 %v938
    %958 = vmatprep.subr.mxu0 0.0
    %959 = vmatpush1.msra.mxu0 %v939
    %960 = vmatprep.subr.mxu0 0.0
    %961 = vmatpush1.msra.mxu0 %v940
    %962 = vmatprep.subr.mxu0 0.0
    %963 = vmatpush1.msra.mxu0 %v941
    %964 = vmatprep.subr.mxu0 0.0
    %965 = vmatpush1.msra.mxu0 %v942
    %966 = vmatprep.subr.mxu0 0.0
    %967 = vmatpush1.msra.mxu0 %v943
    %968 = vmatprep.subr.mxu0 0.0
    %969 = vmatpush1.msra.mxu0 %v944
    %970 = vmatprep.subr.mxu0 0.0
    %971 = vmatpush1.msra.mxu0 %v945
    %972 = vmatprep.subr.mxu0 0.0
    %973 = vmatpush1.msra.mxu0 %v946
    %974 = vmatprep.subr.mxu0 0.0
    %975 = vmatpush1.msra.mxu0 %v947
    %976 = vmatprep.subr.mxu0 0.0
    %977 = vmatpush1.msra.mxu0 %v948
    %978 = vmatprep.subr.mxu0 0.0
    %979 = vmatpush1.msra.mxu0 %v949
    %980 = vmatprep.subr.mxu0 0.0
    %981 = vmatpush1.msra.mxu0 %v950
    %982 = vmatprep.subr.mxu0 0.0
    %983 = vmatpush1.msra.mxu0 %v951
    %984 = vmatprep.subr.mxu0 0.0
    %985 = vmatpush1.msra.mxu0 0.0
    %986 = vmatprep.subr.mxu0 0.0
    %987 = vmatpush1.msra.mxu0 0.0
    %988 = vmatprep.subr.mxu0 0.0
    %989 = vmatpush1.msra.mxu0 0.0
    %990 = vmatprep.subr.mxu0 0.0
    %991 = vmatpush1.msra.mxu0 0.0
    %992 = vmatprep.subr.mxu0 0.0
    %993 = vmatpush1.msra.mxu0 0.0
    %994 = vmatprep.subr.mxu0 0.0
    %995 = vmatpush1.msra.mxu0 0.0
    %996 = vmatprep.subr.mxu0 0.0
    %997 = vmatpush1.msra.mxu0 0.0
    %998 = vmatprep.subr.mxu0 0.0
    %999 = vmatpush1.msra.mxu0 0.0
    %1000 = vmatprep.subr.mxu0 0.0
    %1001 = vmatpush1.msra.mxu0 0.0
    %1002 = vmatprep.subr.mxu0 0.0
    %1003 = vmatpush1.msra.mxu0 0.0
    %1004 = vmatprep.subr.mxu0 0.0
    %1005 = vmatpush1.msra.mxu0 0.0
    %1006 = vmatprep.subr.mxu0 0.0
    %1007 = vmatpush1.msra.mxu0 0.0
    %1008 = vmatprep.subr.mxu0 0.0
    %1009 = vmatpush1.msra.mxu0 0.0
    %1010 = vmatprep.subr.mxu0 0.0
    %1011 = vmatpush1.msra.mxu0 0.0
    %1012 = vmatprep.subr.mxu0 0.0
    %1013 = vmatpush1.msra.mxu0 0.0
    %1014 = vmatprep.subr.mxu0 0.0
    %1015 = vmatpush1.msra.mxu0 0.0
    %1016 = vmatprep.mubr.f32.mxu0 0.0
    %1017 = vmatmul.mubr.f32.gmra.mrb[0].mxu0 %v933
    %v1018 = vpop.f32.mrb[0].mxu0
    %v1019 = vadd.f32 0.0, %v1018
    %v1020 = vpop.f32.mrb[0].mxu0
    %1021 = vdwg.mxu0
    %vm1022 = vcmp.lt.s32.totalorder %v200, 32
    %v1023 = vmax.f32 %v1019, 0.0
    %v1024 = vsel %vm1022, %v1019, %v1023
    %1025 = vst [vmem:[#allocation6] sm:$0xff] %v1024
    %v1026 = vld [vmem:[%s4] sm:$0x3]
    %v1027 = vlaneseq
    %v1028 = vshrl.u32 %v1027, 7
    %v1029 = vsub.s32 0, %v1028
    %v1030 = vrot.slane %v1026, %v1029
    %1032 = vbcast.lane.b32.xlu0 %v1030, 256
    %v1033 = vpop.permute.xlu0 %1032
    %v1034 = vlaneseq
    %v1035 = vshrl.u32 %v1034, 7
    %v1036 = vsub.s32 1, %v1035
    %v1037 = vrot.slane %v1026, %v1036
    %1039 = vbcast.lane.b32.xlu0 %v1037, 256
    %v1040 = vpop.permute.xlu0 %1039
    %vm1041 = vcmp.eq.s32.totalorder %v1033, %v200
    %vm1042 = vcmp.eq.s32.totalorder %v1040, %v200
    %v1043 = vsel %vm1041, 1.0, 0.0
    %v1044 = vsel %vm1042, 1.0, 0.0
    %vm1045 = vcmask 523264
    %v1046 = vsel %vm1045, %v1043, 0.0
    %v1047 = vrot.slane %v1046, 4
    %v1048 = vadd.f32 %v1046, %v1047
    %v1049 = vrot.slane %v1048, 2
    %v1050 = vadd.f32 %v1048, %v1049
    %v1051 = vrot.slane %v1050, 1
    %v1052 = vadd.f32 %v1050, %v1051
    %v1053 = vsel %vm1045, %v1044, 0.0
    %v1054 = vrot.slane %v1053, 4
    %v1055 = vadd.f32 %v1053, %v1054
    %v1056 = vrot.slane %v1055, 2
    %v1057 = vadd.f32 %v1055, %v1056
    %v1058 = vrot.slane %v1057, 1
    %v1059 = vadd.f32 %v1057, %v1058
    %v1060 = vld [vmem:[%s5] sm:$0x3]
    %1062 = vset.pattern.permute.xlu0 0
    %1063 = vperm.xlu0 %1062, %v1060
    %v1064 = vpop.permute.xlu0 %1063
    %v1065 = vrot.slane %v1064, 1
    %v1068 = vmul.f32 %v1052, %v1064
    %v1069 = vmul.f32 %v1059, %v1065
    %v1072 = vrot.slane %v1069, 7
    %v1073 = vsel %vm843, %v1072, %v1068
    %v1074 = vsel %vm1045, %v1073, 0
    %1076 = vmatprep.subr.mxu0 0.0
    %1077 = vmatpush1.msra.mxu0 %v41
    %1078 = vmatprep.subr.mxu0 0.0
    %1079 = vmatpush1.msra.mxu0 %v42
    %1080 = vmatprep.subr.mxu0 0.0
    %1081 = vmatpush1.msra.mxu0 %v43
    %1082 = vmatprep.subr.mxu0 0.0
    %1083 = vmatpush1.msra.mxu0 %v44
    %1084 = vmatprep.subr.mxu0 0.0
    %1085 = vmatpush1.msra.mxu0 %v45
    %1086 = vmatprep.subr.mxu0 0.0
    %1087 = vmatpush1.msra.mxu0 %v46
    %1088 = vmatprep.subr.mxu0 0.0
    %1089 = vmatpush1.msra.mxu0 %v47
    %1090 = vmatprep.subr.mxu0 0.0
    %1091 = vmatpush1.msra.mxu0 %v48
    %1092 = vmatprep.subr.mxu0 0.0
    %1093 = vmatpush1.msra.mxu0 0.0
    %1094 = vmatprep.subr.mxu0 0.0
    %1095 = vmatpush1.msra.mxu0 0.0
    %1096 = vmatprep.subr.mxu0 0.0
    %1097 = vmatpush1.msra.mxu0 0.0
    %1098 = vmatprep.subr.mxu0 0.0
    %1099 = vmatpush1.msra.mxu0 0.0
    %1100 = vmatprep.subr.mxu0 0.0
    %1101 = vmatpush1.msra.mxu0 0.0
    %1102 = vmatprep.subr.mxu0 0.0
    %1103 = vmatpush1.msra.mxu0 0.0
    %1104 = vmatprep.subr.mxu0 0.0
    %1105 = vmatpush1.msra.mxu0 0.0
    %1106 = vmatprep.subr.mxu0 0.0
    %1107 = vmatpush1.msra.mxu0 0.0
    %1108 = vmatprep.subr.mxu0 0.0
    %1109 = vmatpush1.msra.mxu0 0.0
    %1110 = vmatprep.subr.mxu0 0.0
    %1111 = vmatpush1.msra.mxu0 0.0
    %1112 = vmatprep.subr.mxu0 0.0
    %1113 = vmatpush1.msra.mxu0 0.0
    %1114 = vmatprep.subr.mxu0 0.0
    %1115 = vmatpush1.msra.mxu0 0.0
    %1116 = vmatprep.subr.mxu0 0.0
    %1117 = vmatpush1.msra.mxu0 0.0
    %1118 = vmatprep.subr.mxu0 0.0
    %1119 = vmatpush1.msra.mxu0 0.0
    %1120 = vmatprep.subr.mxu0 0.0
    %1121 = vmatpush1.msra.mxu0 0.0
    %1122 = vmatprep.subr.mxu0 0.0
    %1123 = vmatpush1.msra.mxu0 0.0
    %1124 = vmatprep.subr.mxu0 0.0
    %1125 = vmatpush1.msra.mxu0 0.0
    %1126 = vmatprep.subr.mxu0 0.0
    %1127 = vmatpush1.msra.mxu0 0.0
    %1128 = vmatprep.subr.mxu0 0.0
    %1129 = vmatpush1.msra.mxu0 0.0
    %1130 = vmatprep.subr.mxu0 0.0
    %1131 = vmatpush1.msra.mxu0 0.0
    %1132 = vmatprep.subr.mxu0 0.0
    %1133 = vmatpush1.msra.mxu0 0.0
    %1134 = vmatprep.subr.mxu0 0.0
    %1135 = vmatpush1.msra.mxu0 0.0
    %1136 = vmatprep.subr.mxu0 0.0
    %1137 = vmatpush1.msra.mxu0 0.0
    %1138 = vmatprep.subr.mxu0 0.0
    %1139 = vmatpush1.msra.mxu0 0.0
    %1140 = vmatprep.mubr.f32.mxu0 0.0
    %1141 = vmatmul.mubr.f32.gmra.mrb[0].mxu0 %v1074
    %v1142 = vpop.f32.mrb[0].mxu0
    %v1143 = vadd.f32 0.0, %v1142
    %v1144 = vpop.f32.mrb[0].mxu0
    %1145 = vdwg.mxu0
    %vm1146 = vcmask 254976
    %1147 = vst.msk [vmem:[#allocation7] sm:$0x3] %vm1146, %v1143
    // Predicated region
    $region30: #{tpu_custom_call.1} parent=1 // pred_check
      _
    $region31: #{tpu_custom_call.1} parent=1 // pred_check_branch
      %1149 = sbr.rel (0) target = $region33
    $region32: #{tpu_custom_call.1} parent=1 // pred_region
      %s1151 = ssub.s32 128, 128
      %1152 = vsyncadd [#allocation5], %s1151
      %s1154 = sshll.u32 [#allocation6], 4
      %s1155 = int_to_ptr.vmem [resolvable:$true] %s1154
      %1157 = dma.vmem_to_hbm [thread:$0]  %s1155, 128, %s6, [#allocation5]
    $region33: #{tpu_custom_call.1} parent=1 // pred_fallthru
      _
    // Predicated region
    $region34: #{tpu_custom_call.1} parent=1 // pred_check
      _
    $region35: #{tpu_custom_call.1} parent=1 // pred_check_branch
      %1159 = sbr.rel (0) target = $region37
    $region36: #{tpu_custom_call.1} parent=1 // pred_region
      %s1161 = ssub.s32 32, 32
      %1162 = vsyncadd [#allocation8], %s1161
      %s1164 = sshll.u32 [#allocation7], 4
      %s1165 = int_to_ptr.vmem [resolvable:$true] %s1164
      %1167 = dma.vmem_to_hbm [thread:$0]  %s1165, 32, %s7, [#allocation8]
    $region37: #{tpu_custom_call.1} parent=1 // pred_fallthru
      _
    // Predicated region
    $region38: #{tpu_custom_call.1} parent=1 // pred_check
      _
    $region39: #{tpu_custom_call.1} parent=1 // pred_check_branch
      %1169 = sbr.rel (0) target = $region41
    $region40: #{tpu_custom_call.1} parent=1 // pred_region
      %1170 = dma.done [#allocation5], 128
    $region41: #{tpu_custom_call.1} parent=1 // pred_fallthru
      _
    // Predicated region
    $region42: #{tpu_custom_call.1} parent=1 // pred_check
      _
    $region43: #{tpu_custom_call.1} parent=1 // pred_check_branch
      %1172 = sbr.rel (0) target = $region45
    $region44: #{tpu_custom_call.1} parent=1 // pred_region
      %1173 = dma.done [#allocation8], 32
    $region45: #{tpu_custom_call.1} parent=1 // pred_fallthru
      _
    %1174 = vsyncpa [#allocation4], 1
    %1175 = vsyncpa [#allocation5], 1
    %1176 = vsyncpa [#allocation8], 1

</llo_original>
